<compile_context>
chip_gen: v6e
topology: v6e:2x2x1
jax: 0.10.0
libtpu: 0.0.40
codegen_flags: <defaults>
</compile_context>

<pallas_src>
import functools

import jax
import jax.numpy as jnp
from jax.experimental import pallas as pl
from jax.experimental.pallas import tpu as pltpu

_LANE = 128
_SUBLANE = 8
_MIN_GRID_STEPS = 8  # keep the grid long enough for v7x's 2 TensorCores


# ----------------------------- kernels --------------------------------------


def _transe_kernel(e_ref, r_ref, o_ref):
    o_ref[...] = e_ref[...] + r_ref[...]


def _distmult_kernel(e_ref, r_ref, o_ref):
    o_ref[...] = e_ref[...] * r_ref[...]


def _rotate_kernel(e_ref, r_ref, o_ref):
    # Complex (Hadamard) product: last dim is (real | imag) halves.
    # Two direct half stores (no concatenate -> no full-tile VMEM temporary,
    # less store traffic).  When h % 128 == 0 everything is lane-aligned.
    h = e_ref.shape[-1] // 2
    node_re = e_ref[:, :h]
    node_im = e_ref[:, h:]
    edge_re = r_ref[:, :h]
    edge_im = r_ref[:, h:]
    o_ref[:, :h] = node_re * edge_re - node_im * edge_im
    o_ref[:, h:] = node_re * edge_im + node_im * edge_re


# ----------------------------- tiling helpers --------------------------------


def _round_up(x, m):
    return ((x + m - 1) // m) * m


def _sublane_multiple(dtype):
    """Dtype-aware sublane packing: 8 rows for f32, 16 for bf16, 32 for int8."""
    itemsize = jnp.dtype(dtype).itemsize
    return max(_SUBLANE, 32 // max(itemsize, 1))


@functools.lru_cache(maxsize=None)
def _tile_budget_bytes():
    """Per-array, per-tile byte budget (generation-aware)."""
    try:
        kind = jax.devices()[0].device_kind.lower()
    except Exception:  # conservative default if device query fails
        kind = ""
    # v5e (~0.8 TB/s): a 2 MiB step already takes ~7.5us, per-step overhead <5%.
    if "v5 lite" in kind or "v5lite" in kind or "v5e" in kind:
        return 2 * 1024 * 1024
    # v6e / v7x: 4 MiB tiles cut the ~0.35us/step overhead to <8% of wall time
    # while live VMEM stays at 3 arrays x 2 buffers x 4 MiB = 24 MiB.
    return 4 * 1024 * 1024


def _pick_row_tile(n_rows, row_bytes, sublane_mult, tile_budget):
    """Largest sublane-aligned row tile within the byte budget, with a cap so
    the grid keeps >= _MIN_GRID_STEPS steps when there are enough rows."""
    tn = max(sublane_mult,
             (tile_budget // max(row_bytes, 1)) // sublane_mult * sublane_mult)
    if n_rows >= _MIN_GRID_STEPS * sublane_mult:
        cap = _round_up(-(-n_rows // _MIN_GRID_STEPS), sublane_mult)
        tn = min(tn, max(cap, sublane_mult))
    tn = min(tn, _round_up(n_rows, sublane_mult))
    return max(tn, sublane_mult)


def _elementwise_call(kernel, a, b, *, flops_per_elem):
    """Run a 2-input elementwise kernel over (rows, cols), tiled on rows.

    Ragged row counts are handled by a partial last block (no host-side pad
    and no output slice): OOB reads are unused, OOB writes are masked.
    """
    n_rows, n_cols = a.shape
    itemsize = jnp.dtype(a.dtype).itemsize
    sublane_mult = _sublane_multiple(a.dtype)
    tile_budget = _tile_budget_bytes()
    tn = _pick_row_tile(n_rows, n_cols * itemsize, sublane_mult, tile_budget)

    grid = (pl.cdiv(n_rows, tn),)
    spec = pl.BlockSpec((tn, n_cols), lambda i: (i, 0))

    # Size the scoped-VMEM reservation from actual need:
    # 3 arrays x 2 pipeline buffers x tile, plus margin (~8 tiles total).
    tile_bytes = tn * n_cols * itemsize
    vmem_limit = min(96 * 1024 * 1024, max(24 * 1024 * 1024, 8 * tile_bytes))

    return pl.pallas_call(
        kernel,
        out_shape=jax.ShapeDtypeStruct((n_rows, n_cols), a.dtype),
        grid_spec=pl.GridSpec(grid=grid, in_specs=[spec, spec], out_specs=spec),
        compiler_params=pltpu.CompilerParams(
            dimension_semantics=("parallel",),
            vmem_limit_bytes=vmem_limit,
        ),
        cost_estimate=pl.CostEstimate(
            flops=flops_per_elem * n_rows * n_cols,
            transcendentals=0,
            bytes_accessed=3 * n_rows * n_cols * itemsize,
        ),
    )(a, b)


# ----------------------------- wrapper ---------------------------------------


@functools.partial(jax.jit, static_argnames=("op_type",))
def kge_op(op_type: str, ents: jax.Array, rels: jax.Array) -> jax.Array:
    """Pallas equivalent of KGEOp(op_type)(ents, rels)."""
    assert ents.shape == rels.shape and ents.dtype == rels.dtype
    orig_shape = ents.shape
    d = orig_shape[-1]
    total = ents.size

    if op_type in ("TransE", "DistMult"):
        kernel = _transe_kernel if op_type == "TransE" else _distmult_kernel
        if total % _LANE == 0:
            # Lane-dense (rows, 128) slab -- pure reshape, no copy.
            a = ents.reshape(total // _LANE, _LANE)
            b = rels.reshape(total // _LANE, _LANE)
        else:
            # Keep the natural (rows, d) layout: last dim may be lane-sparse,
            # but that beats an extra full-array HBM pad + slice pass.
            a = ents.reshape(-1, d)
            b = rels.reshape(-1, d)
        out = _elementwise_call(kernel, a, b, flops_per_elem=1)
        return out.reshape(orig_shape)

    if op_type == "RotatE":
        assert d % 2 == 0, "RotatE requires an even embedding dimension"
        n = total // d
        a = ents.reshape(n, d)
        b = rels.reshape(n, d)
        # In-kernel half slices / half stores are fully lane-aligned when
        # d/2 % 128 == 0 (typical embedding sizes 256/512/1024); otherwise
        # correct but masked (slower) -- no extra HBM passes either way.
        # TODO(synk): for very large d (one 8-row tile > tile budget) add a
        # second grid axis over (n, 2, d/2) halves instead of the row clamp.
        out = _elementwise_call(_rotate_kernel, a, b, flops_per_elem=3)
        return out.reshape(orig_shape)

    raise ValueError(f"unknown op_type: {op_type}")


# ----------------------------- reference -------------------------------------


def _ref(op_type, ents, rels):
    if op_type == "TransE":
        return ents + rels
    if op_type == "DistMult":
        return ents * rels
    h = ents.shape[-1] // 2
    nr, ni = ents[..., :h], ents[..., h:]
    er, ei = rels[..., :h], rels[..., h:]
    return jnp.concatenate([nr * er - ni * ei, nr * ei + ni * er], axis=-1)


# ----------------------------- main -------------------------------------------


if __name__ == "__main__":
    key = jax.random.PRNGKey(0)

    # Aligned case, ragged case (exercises the partial-block path), and a
    # bf16 case with d/2 % 128 == 0 (exercises the aligned RotatE fast path).
    cases = [((16, 32), jnp.float32), ((13, 48), jnp.float32), ((16, 256), jnp.bfloat16)]
    for idx, (shape, dtype) in enumerate(cases):
        k1, k2 = jax.random.split(jax.random.fold_in(key, idx))
        ents = jax.random.normal(k1, shape, dtype=jnp.float32).astype(dtype)
        rels = jax.random.normal(k2, shape, dtype=jnp.float32).astype(dtype)
        tol = 1e-5 if dtype == jnp.float32 else 2e-2
        for op_type in ("TransE", "DistMult", "RotatE"):
            out = jax.block_until_ready(kge_op(op_type, ents, rels))
            ref = _ref(op_type, ents, rels)
            assert out.shape == ref.shape and out.dtype == ref.dtype
            assert jnp.allclose(out.astype(jnp.float32), ref.astype(jnp.float32),
                                atol=tol, rtol=tol), (op_type, shape, dtype)

    print("KERNEL_OK")
</pallas_src>

<mosaic_0001>
module attributes {stable_mosaic.version = 11 : i64} {
  func.func @_transe_kernel(%arg0: i32, %arg1: memref<8x128xf32, #tpu.memory_space<vmem>>, %arg2: memref<8x128xf32, #tpu.memory_space<vmem>>, %arg3: memref<8x128xf32, #tpu.memory_space<vmem>>) attributes {dimension_semantics = [#tpu.dimension_semantics<parallel>], iteration_bounds = array<i64: 1>, scalar_prefetch = 0 : i64, scratch_operands = 0 : i64, tpu.core_type = #tpu.core_type<tc>, window_params = [{transform_indices = @transform_0, window_bounds = array<i64: 8, 128>}, {transform_indices = @transform_1, window_bounds = array<i64: 8, 128>}, {transform_indices = @transform_2, window_bounds = array<i64: 8, 128>}]} {
    %c0 = arith.constant 0 : index
    %c0_0 = arith.constant 0 : index
    %0 = vector.load %arg1[%c0, %c0_0] : memref<8x128xf32, #tpu.memory_space<vmem>>, vector<8x128xf32>
    %c0_1 = arith.constant 0 : index
    %c0_2 = arith.constant 0 : index
    %1 = vector.load %arg2[%c0_1, %c0_2] : memref<8x128xf32, #tpu.memory_space<vmem>>, vector<8x128xf32>
    %2 = arith.addf %0, %1 : vector<8x128xf32>
    %c0_3 = arith.constant 0 : index
    %c0_4 = arith.constant 0 : index
    %3 = vector.load %arg3[%c0_3, %c0_4] : memref<8x128xf32, #tpu.memory_space<vmem>>, vector<8x128xf32>
    tpu.vector_store %arg3[%c0_3, %c0_4], %2 {strides = array<i32>} : memref<8x128xf32, #tpu.memory_space<vmem>>, vector<8x128xf32>,
    return
  }
  func.func @transform_0(%arg0: i32) -> (i32, i32) {
    %c0_i32 = arith.constant 0 : i32
    %c0_i32_0 = arith.constant 0 : i32
    return %arg0, %c0_i32 : i32, i32
  }
  func.func @transform_1(%arg0: i32) -> (i32, i32) {
    %c0_i32 = arith.constant 0 : i32
    %c0_i32_0 = arith.constant 0 : i32
    return %arg0, %c0_i32 : i32, i32
  }
  func.func @transform_2(%arg0: i32) -> (i32, i32) {
    %c0_i32 = arith.constant 0 : i32
    %c0_i32_0 = arith.constant 0 : i32
    return %arg0, %c0_i32 : i32, i32
  }
}

</mosaic_0001>

<llo_original>
// kernel: kge_op.1
$region0: #{kge_op.1}
  #allocation0 [shape = 'u32[]', space=smem, size = 0x4, offset = 0x4, fixed_abs, tag = 'smem constant byte address 0x4 - core index']
  #allocation1 [shape = 'u32[144,128]{1,0:T(1,128)}', space=vmem, size = 0x12000, scoped, tag = 'internal scratch']
  %s0 = inlined_call_operand.vmem [shape: f32[4,128], index: 0, kind: input, shape index: {}]
  %s1 = inlined_call_operand.vmem [shape: f32[4,128], index: 1, kind: input, shape index: {}]
  %s2 = inlined_call_operand.vmem [shape: f32[4,128], index: 2, kind: output, shape index: {}]
  %s3 = sld [smem:[#allocation0]]
  $region48: #{kge_op.1} parent=0
    _
  %s5 = ssub.s32 1, %s3
  %s6 = scalar_select 0, %s5, %s3
  $region1: #{kge_op.1} parent=0
    #allocation2 [shape = 'u8[4096]{0}', space=vmem, size = 0x1000, scoped, tag = 'output window, operand 0, single buffered']
    // Predicated region
    $region2: #{kge_op.1} parent=1 // pred_check
      _
    $region3: #{kge_op.1} parent=1 // pred_check_branch
      %8 = sbr.rel (0) target = $region5
    $region4: #{kge_op.1} parent=1 // pred_region
      _
    $region5: #{kge_op.1} parent=1 // pred_fallthru
      _
    // Predicated region
    $region6: #{kge_op.1} parent=1 // pred_check
      _
    $region7: #{kge_op.1} parent=1 // pred_check_branch
      %10 = sbr.rel (0) target = $region9
    $region8: #{kge_op.1} parent=1 // pred_region
      _
    $region9: #{kge_op.1} parent=1 // pred_fallthru
      _
    %v11 = vld [vmem:[%s0] sm:$0xff]
    %v12 = vld [vmem:[%s1] sm:$0xff]
    %v13 = vadd.f32 %v11, %v12
    %14 = vst [vmem:[#allocation2] sm:$0xff] %v13
    // Predicated region
    $region10: #{kge_op.1} parent=1 // pred_check
      _
    $region11: #{kge_op.1} parent=1 // pred_check_branch
      %16 = sbr.rel (0) target = $region13
    $region12: #{kge_op.1} parent=1 // pred_region
      // Predicated region
      $region14: #{kge_op.1} parent=12 // pred_check
        _
      $region15: #{kge_op.1} parent=12 // pred_check_branch
        %18 = sbr.rel (0) target = $region17
      $region16: #{kge_op.1} parent=12 // pred_region
        // Predicated region
        $region18: #{kge_op.1} parent=16 // pred_check
          _
        $region19: #{kge_op.1} parent=16 // pred_check_branch
          %20 = sbr.rel target = $region21
        $region20: #{kge_op.1} parent=16 // pred_region
          // Predicated region
          $region33: #{kge_op.1} parent=20 // pred_check
            _
          $region34: #{kge_op.1} parent=20 // pred_check_branch
            %36 = sbr.rel (0) target = $region36
          $region35: #{kge_op.1} parent=20 // pred_region
            %s38 = ssub.s32 16, 1
            loop: start=0, step=1, limit=1
            $region37: #{kge_op.1} parent=35 // loop_pre_header
              _
            $region38: #{kge_op.1} parent=35 // loop_header
              %s40 = sphi 0, %s44
              %p41 = scmp.ge.s32.totalorder %s40, 1
              %s45 = sphi [#allocation2], [#allocation2]
              %s46 = sphi %s2, %s2
            $region39: #{kge_op.1} parent=35 // loop_header_branch
              %43 = sbr.rel (%p41) target = $region43
            $region40: #{kge_op.1} parent=35 // loop_body
              %v47 = vld [vmem:[%s45] sm:%s38]
              %48 = vst [vmem:[%s46] sm:%s38] %v47
            $region41: #{kge_op.1} parent=35 // loop_footer
              %s44 = sadd.s32 1, %s40
            $region42: #{kge_op.1} parent=35 // loop_footer_branch
              %39 = sbr.rel target = $region38
            $region43: #{kge_op.1} parent=35 // loop_exit
              _
          $region36: #{kge_op.1} parent=20 // pred_fallthru
            _
        $region21: #{kge_op.1} parent=16 // pred_fallthru
          _
        // Predicated region
        $region22: #{kge_op.1} parent=16 // pred_check
          _
        $region23: #{kge_op.1} parent=16 // pred_check_branch
          %22 = sbr.rel (0) target = $region25
        $region24: #{kge_op.1} parent=16 // pred_region
          %s24 = ssub.s32 16, 1
          loop: start=0, step=1, limit=1
          $region26: #{kge_op.1} parent=24 // loop_pre_header
            _
          $region27: #{kge_op.1} parent=24 // loop_header
            %s26 = sphi 0, %s30
            %p27 = scmp.ge.s32.totalorder %s26, 1
            %s31 = sphi [#allocation2], [#allocation2]
            %s32 = sphi %s2, %s2
          $region28: #{kge_op.1} parent=24 // loop_header_branch
            %29 = sbr.rel (%p27) target = $region32
          $region29: #{kge_op.1} parent=24 // loop_body
            %v33 = vld [vmem:[%s31] sm:%s24]
            %34 = vst [vmem:[%s32] sm:%s24] %v33
          $region30: #{kge_op.1} parent=24 // loop_footer
            %s30 = sadd.s32 1, %s26
          $region31: #{kge_op.1} parent=24 // loop_footer_branch
            %25 = sbr.rel target = $region27
          $region32: #{kge_op.1} parent=24 // loop_exit
            _
        $region25: #{kge_op.1} parent=16 // pred_fallthru
          _
      $region17: #{kge_op.1} parent=12 // pred_fallthru
        _
      %49 = vnop
    $region13: #{kge_op.1} parent=1 // pred_fallthru
      _
    // Predicated region
    $region44: #{kge_op.1} parent=1 // pred_check
      _
    $region45: #{kge_op.1} parent=1 // pred_check_branch
      %51 = sbr.rel (0) target = $region47
    $region46: #{kge_op.1} parent=1 // pred_region
      _
    $region47: #{kge_op.1} parent=1 // pred_fallthru
      _

</llo_original>
